<compile_context>
chip_gen: v5e
topology: v5e:2x2
jax: 0.10.0
libtpu: 0.0.40
codegen_flags: <defaults>
</compile_context>

<pallas_src>
import jax
import jax.numpy as jnp
from jax.experimental import pallas as pl
from jax.experimental.pallas import tpu as pltpu


def _bert_pooler_kernel(x_ref, w_ref, b_ref, o_ref):
    # x_ref : (TB, D) bf16  -- first-token activations for this batch tile
    # w_ref : (D, D)  bf16  -- dense weight as (in_features, out_features)
    # b_ref : (1, D)  f32   -- dense bias
    # o_ref : (TB, D)       -- pooled output tile
    y = jnp.dot(x_ref[...], w_ref[...], preferred_element_type=jnp.float32)  # MXU, f32 acc
    o_ref[...] = jnp.tanh(y + b_ref[...]).astype(o_ref.dtype)                # VPU add, EUP tanh


def _round_up(x, m):
    return ((x + m - 1) // m) * m


def _choose_tiling(batch, d_model, target=512):
    """Return (batch_tile, padded_batch).

    * Small / weight-DMA-bound batches: one block (block dim == full array dim is
      always (8,128)-legal), no padding, no megacore split (splitting would just
      duplicate the weight fetch per TensorCore).
    * Large / activation-dominated batches: multiple-of-8 tiles, batch padded up to
      a multiple of the tile, and >= 2 grid steps so v7x's two TensorCores share work.
    """
    if batch <= target and batch < max(d_model, 16):
        return batch, batch
    if batch <= 2 * target:
        tb = max(8, _round_up((batch + 1) // 2, 8))   # ~half the batch -> 2 grid steps
    else:
        tb = target
    padded = _round_up(batch, tb)
    return tb, padded


def prepare_pooler_params(weight, bias):
    """One-time parameter prep (do NOT call per forward pass).

    weight : (d_model, d_model) in PyTorch nn.Linear layout (out_features, in_features).
    bias   : (d_model,)
    Returns (w_bf16 with shape (in_features, out_features), bias as (1, d_model) f32).
    """
    w = jnp.asarray(weight).T.astype(jnp.bfloat16)
    b = jnp.asarray(bias).reshape(1, -1).astype(jnp.float32)
    return w, b


def bert_pooler(hidden_states, w_bf16, bias_2d, *, batch_tile=None, out_dtype=None):
    """hidden_states: (B, S, D); w_bf16/bias_2d from prepare_pooler_params.
    Returns tanh(hidden_states[:, 0] @ W_in_out + b), dtype = hidden_states.dtype
    (or out_dtype, e.g. bf16, if the downstream consumer tolerates it)."""
    B, S, D = hidden_states.shape
    assert w_bf16.shape == (D, D), "expected prepared (in_features, out_features) weight"
    out_dtype = out_dtype or hidden_states.dtype

    # first_token_tensor = hidden_states[:, 0]; bf16 cast fused into the same slice/copy
    # so the kernel DMAs 2 bytes/elem of activations and never touches the other S-1 tokens.
    first_token = hidden_states[:, 0, :].astype(jnp.bfloat16)

    if batch_tile is not None:
        tb = batch_tile
        padded = _round_up(B, tb)
    else:
        tb, padded = _choose_tiling(B, D)
    if padded > B:
        first_token = jnp.pad(first_token, ((0, padded - B), (0, 0)))

    grid = (padded // tb,)

    # Real VMEM footprint for the chosen buffer counts, +25% headroom, floored at 4 MiB
    # (covers compiler-internal scratch) and capped at v7x's 64 MiB physical VMEM.
    est = (2 * tb * D * 2                                    # x tile, bf16, double-buffered
           + 2 * tb * D * jnp.dtype(out_dtype).itemsize      # out tile, double-buffered
           + 1 * D * D * 2                                   # weight, bf16, Buffered(1)
           + 1 * D * 4)                                      # bias, f32, Buffered(1)
    vmem_limit = int(min(max(est * 1.25, 4 * 1024 * 1024), 64 * 1024 * 1024))

    out = pl.pallas_call(
        _bert_pooler_kernel,
        out_shape=jax.ShapeDtypeStruct((padded, D), out_dtype),
        grid_spec=pltpu.PrefetchScalarGridSpec(
            num_scalar_prefetch=0,
            grid=grid,
            in_specs=[
                # x tile: lane-dense (full D on the lane axis), double-buffered.
                pl.BlockSpec((tb, D), lambda i: (i, 0)),
                # Grid-invariant weight/bias: fetched once -> single-buffered saves VMEM.
                pl.BlockSpec((D, D), lambda i: (0, 0), pipeline_mode=pl.Buffered(1)),
                pl.BlockSpec((1, D), lambda i: (0, 0), pipeline_mode=pl.Buffered(1)),
            ],
            out_specs=pl.BlockSpec((tb, D), lambda i: (i, 0)),  # lane-dense output
        ),
        compiler_params=pltpu.CompilerParams(
            dimension_semantics=("parallel",),   # batch tiles shard across TensorCores
            vmem_limit_bytes=vmem_limit,
        ),
    )(first_token, w_bf16, bias_2d)

    return out[:B] if padded > B else out


if __name__ == "__main__":
    # Small shapes consistent with BertPooler's forward: hidden_states (B, S, D).
    B, S, D = 2, 8, 32

    root = jax.random.PRNGKey(0)
    kx, kw, kb = jax.random.split(root, 3)

    hidden_states = jax.random.normal(kx, (B, S, D), jnp.float32)
    # nn.Linear(d_model, d_model) weight in PyTorch layout (out_features, in_features).
    weight = 0.02 * jax.random.normal(kw, (D, D), jnp.float32)
    bias = 0.02 * jax.random.normal(kb, (D,), jnp.float32)

    # One-time param prep (hoisted out of the per-call path).
    w_bf16, b_2d = prepare_pooler_params(weight, bias)

    out = bert_pooler(hidden_states, w_bf16, b_2d)
    jax.block_until_ready(out)
    assert out.shape == (B, D)

    # Pure-JAX f32 reference; tolerance accounts for the bf16 MXU operands/activations.
    ref = jnp.tanh(hidden_states[:, 0, :] @ weight.T + bias)
    assert jnp.allclose(out, ref, atol=2e-2, rtol=2e-2), "mismatch vs reference"

    print("KERNEL_OK")
</pallas_src>

<mosaic_0001>
module attributes {stable_mosaic.version = 11 : i64} {
  func.func @_bert_pooler_kernel(%arg0: i32, %arg1: memref<2x32xbf16, #tpu.memory_space<vmem>>, %arg2: memref<32x32xbf16, #tpu.memory_space<vmem>>, %arg3: memref<1x32xf32, #tpu.memory_space<vmem>>, %arg4: memref<2x32xf32, #tpu.memory_space<vmem>>) attributes {dimension_semantics = [#tpu.dimension_semantics<parallel>], iteration_bounds = array<i64: 1>, scalar_prefetch = 0 : i64, scratch_operands = 0 : i64, tpu.core_type = #tpu.core_type<tc>, window_params = [{transform_indices = @transform_0, window_bounds = array<i64: 2, 32>}, {pipeline_mode = #tpu.pipeline_mode<synchronous>, transform_indices = @transform_1, window_bounds = array<i64: 32, 32>}, {pipeline_mode = #tpu.pipeline_mode<synchronous>, transform_indices = @transform_2, window_bounds = array<i64: 1, 32>}, {transform_indices = @transform_3, window_bounds = array<i64: 2, 32>}]} {
    %c0 = arith.constant 0 : index
    %c0_0 = arith.constant 0 : index
    %0 = vector.load %arg1[%c0, %c0_0] : memref<2x32xbf16, #tpu.memory_space<vmem>>, vector<2x32xbf16>
    %c0_1 = arith.constant 0 : index
    %c0_2 = arith.constant 0 : index
    %1 = vector.load %arg2[%c0_1, %c0_2] : memref<32x32xbf16, #tpu.memory_space<vmem>>, vector<32x32xbf16>
    %cst = arith.constant dense<0.000000e+00> : vector<2x32xf32>
    %2 = tpu.matmul %0, %1, %cst {dimension_numbers = #tpu.dot_dimension_numbers<[1], [0], [0], [1], [0, 0, 1, 1], [], []>} : vector<2x32xbf16>, vector<32x32xbf16>, vector<2x32xf32> -> vector<2x32xf32>
    %c0_3 = arith.constant 0 : index
    %c0_4 = arith.constant 0 : index
    %3 = vector.load %arg3[%c0_3, %c0_4] : memref<1x32xf32, #tpu.memory_space<vmem>>, vector<1x32xf32>
    %4 = vector.broadcast %3 : vector<1x32xf32> to vector<2x32xf32>
    %5 = arith.addf %2, %4 : vector<2x32xf32>
    %6 = math.tanh %5 : vector<2x32xf32>
    %c0_5 = arith.constant 0 : index
    %c0_6 = arith.constant 0 : index
    %7 = vector.load %arg4[%c0_5, %c0_6] : memref<2x32xf32, #tpu.memory_space<vmem>>, vector<2x32xf32>
    tpu.vector_store %arg4[%c0_5, %c0_6], %6 {strides = array<i32>} : memref<2x32xf32, #tpu.memory_space<vmem>>, vector<2x32xf32>,
    return
  }
  func.func @transform_0(%arg0: i32) -> (i32, i32) {
    %c0_i32 = arith.constant 0 : i32
    %c0_i32_0 = arith.constant 0 : i32
    return %arg0, %c0_i32 : i32, i32
  }
  func.func @transform_1(%arg0: i32) -> (i32, i32) {
    %c0_i32 = arith.constant 0 : i32
    %c0_i32_0 = arith.constant 0 : i32
    %c0_i32_1 = arith.constant 0 : i32
    return %c0_i32, %c0_i32_0 : i32, i32
  }
  func.func @transform_2(%arg0: i32) -> (i32, i32) {
    %c0_i32 = arith.constant 0 : i32
    %c0_i32_0 = arith.constant 0 : i32
    %c0_i32_1 = arith.constant 0 : i32
    return %c0_i32, %c0_i32_0 : i32, i32
  }
  func.func @transform_3(%arg0: i32) -> (i32, i32) {
    %c0_i32 = arith.constant 0 : i32
    %c0_i32_0 = arith.constant 0 : i32
    return %arg0, %c0_i32 : i32, i32
  }
}

</mosaic_0001>

<llo_original>
// kernel: tpu_custom_call.1
$region0: #{tpu_custom_call.1}
  #allocation0 [shape = 'u32[]', space=smem, size = 0x4, offset = 0x4, fixed_abs, tag = 'smem constant byte address 0x4 - core index']
  #allocation1 [shape = 'u32[72,128]{1,0:T(1,128)}', space=vmem, size = 0x9000, scoped, tag = 'internal scratch']
  %s0 = inlined_call_operand.hbm [shape: bf16[2,32], index: 0, kind: input, shape index: {}]
  %s1 = inlined_call_operand.hbm [shape: bf16[32,32], index: 1, kind: input, shape index: {}]
  %s2 = inlined_call_operand.vmem [shape: f32[1,32], index: 2, kind: input, shape index: {}]
  %s3 = inlined_call_operand.hbm [shape: f32[2,32], index: 3, kind: output, shape index: {}]
  %s4 = sld [smem:[#allocation0]]
  $region30: #{tpu_custom_call.1} parent=0
    _
  %s6 = ssub.s32 1, %s4
  %s7 = scalar_select 0, %s6, %s4
  $region1: #{tpu_custom_call.1} parent=0
    #allocation2 [shape = 'u8[512]{0}', space=vmem, size = 0x400, scoped, tag = 'input window, operand 0, single buffered']
    #allocation3 [shape = 's32[1]{0}', space=sflag, size = 0x4, scoped, tag = 'scoped memory for tpu_custom_call.1']
    #allocation4 [shape = 's32[1]{0}', space=sflag, size = 0x4, scoped, tag = 'scoped memory for tpu_custom_call.1']
    #allocation5 [shape = 'u8[8192]{0}', space=vmem, size = 0x2000, scoped, tag = 'input window, operand 1, single buffered']
    #allocation6 [shape = 's32[1]{0}', space=sflag, size = 0x4, scoped, tag = 'scoped memory for tpu_custom_call.1']
    #allocation7 [shape = 'u8[1024]{0}', space=vmem, size = 0x400, scoped, tag = 'output window, operand 0, single buffered']
    %8 = vsyncpa [#allocation3], 0
    %9 = vsyncpa [#allocation6], 0
    %10 = vsyncpa [#allocation4], 0
    // Predicated region
    $region2: #{tpu_custom_call.1} parent=1 // pred_check
      _
    $region3: #{tpu_custom_call.1} parent=1 // pred_check_branch
      %12 = sbr.rel (0) target = $region5
    $region4: #{tpu_custom_call.1} parent=1 // pred_region
      %14 = vsyncadd [#allocation3], 0
      %s16 = sshll.u32 %s0, 4
      %s17 = int_to_ptr.hbm [resolvable:$true] %s16
      %s18 = sshll.u32 [#allocation2], 4
      %s19 = int_to_ptr.vmem [resolvable:$true] %s18
      %21 = dma.hbm_to_vmem [thread:$0]  %s17, 16, %s19, [#allocation3]
    $region5: #{tpu_custom_call.1} parent=1 // pred_fallthru
      _
    // Predicated region
    $region6: #{tpu_custom_call.1} parent=1 // pred_check
      _
    $region7: #{tpu_custom_call.1} parent=1 // pred_check_branch
      %23 = sbr.rel (0) target = $region9
    $region8: #{tpu_custom_call.1} parent=1 // pred_region
      %25 = vsyncadd [#allocation6], 0
      %s26 = sshll.u32 %s1, 4
      %s27 = int_to_ptr.hbm [resolvable:$true] %s26
      %s28 = sshll.u32 [#allocation5], 4
      %s29 = int_to_ptr.vmem [resolvable:$true] %s28
      %34 = dma.hbm_to_vmem [thread:$0]  %s27, 256, %s29, [#allocation6], 64, 64, 4
    $region9: #{tpu_custom_call.1} parent=1 // pred_fallthru
      _
    // Predicated region
    $region10: #{tpu_custom_call.1} parent=1 // pred_check
      _
    $region11: #{tpu_custom_call.1} parent=1 // pred_check_branch
      %36 = sbr.rel (0) target = $region13
    $region12: #{tpu_custom_call.1} parent=1 // pred_region
      _
    $region13: #{tpu_custom_call.1} parent=1 // pred_fallthru
      _
    // Predicated region
    $region14: #{tpu_custom_call.1} parent=1 // pred_check
      _
    $region15: #{tpu_custom_call.1} parent=1 // pred_check_branch
      %38 = sbr.rel (0) target = $region17
    $region16: #{tpu_custom_call.1} parent=1 // pred_region
      %40 = dma.done [#allocation3], 16
    $region17: #{tpu_custom_call.1} parent=1 // pred_fallthru
      _
    // Predicated region
    $region18: #{tpu_custom_call.1} parent=1 // pred_check
      _
    $region19: #{tpu_custom_call.1} parent=1 // pred_check_branch
      %42 = sbr.rel (0) target = $region21
    $region20: #{tpu_custom_call.1} parent=1 // pred_region
      %44 = dma.done [#allocation6], 256
    $region21: #{tpu_custom_call.1} parent=1 // pred_fallthru
      _
    %v46 = vld [vmem:[#allocation2] sm:$0x1]
    %v47 = vld [vmem:[#allocation5] sm:$0xf]
    %v48 = vld [vmem:[#allocation5 + $0x4] sm:$0xf]
    %v49 = vld [vmem:[#allocation5 + $0x8] sm:$0xf]
    %v50 = vld [vmem:[#allocation5 + $0xc] sm:$0xf]
    %v51 = vld [vmem:[%s2] sm:$0x1]
    %v53 = vperm.slane %v51, 0
    %v59 = vunpack.c.l.b16 %v47
    %v60 = vunpack.c.l.b16 %v48
    %v61 = vunpack.c.l.b16 %v49
    %v62 = vunpack.c.l.b16 %v50
    %v63 = vpack.c.b16 %v60, %v59
    %v64 = vpack.c.b16 %v62, %v61
    %vm67 = vcmask 261120
    %v69 = vsel %vm67, %v46, 0
    %71 = vmatpush.bf16.msra.mxu0 0
    %72 = vmatpush.bf16.msra.mxu0 0
    %73 = vmatpush.bf16.msra.mxu0 0
    %74 = vmatpush.bf16.msra.mxu0 0
    %75 = vmatpush.bf16.msra.mxu0 0
    %76 = vmatpush.bf16.msra.mxu0 0
    %77 = vmatpush.bf16.msra.mxu0 %v64
    %78 = vmatpush.bf16.msra.mxu0 %v63
    %79 = vmatmul.bf16.gmra.mxu0 %v69
    %v80 = vpop.f32.mrf.mxu0
    %v81 = vadd.f32 %v53, %v80
    %v82 = vpop.f32.mrf.mxu0
    %83 = vdwg.mxu0
    %v84 = vtanh.pop %v81
    %vm85 = vcmask 254976
    %86 = vst.msk [vmem:[#allocation7] sm:$0x3] %vm85, %v84
    // Predicated region
    $region22: #{tpu_custom_call.1} parent=1 // pred_check
      _
    $region23: #{tpu_custom_call.1} parent=1 // pred_check_branch
      %88 = sbr.rel (0) target = $region25
    $region24: #{tpu_custom_call.1} parent=1 // pred_region
      %90 = vsyncadd [#allocation4], 0
      %s92 = sshll.u32 [#allocation7], 4
      %s93 = int_to_ptr.vmem [resolvable:$true] %s92
      %s94 = sshll.u32 %s3, 4
      %s95 = int_to_ptr.hbm [resolvable:$true] %s94
      %97 = dma.vmem_to_hbm [thread:$0]  %s93, 32, %s95, [#allocation4]
    $region25: #{tpu_custom_call.1} parent=1 // pred_fallthru
      _
    // Predicated region
    $region26: #{tpu_custom_call.1} parent=1 // pred_check
      _
    $region27: #{tpu_custom_call.1} parent=1 // pred_check_branch
      %99 = sbr.rel (0) target = $region29
    $region28: #{tpu_custom_call.1} parent=1 // pred_region
      %101 = dma.done [#allocation4], 32
    $region29: #{tpu_custom_call.1} parent=1 // pred_fallthru
      _
    %102 = vsyncpa [#allocation3], 1
    %103 = vsyncpa [#allocation6], 1
    %104 = vsyncpa [#allocation4], 1

</llo_original>
